<compile_context>
chip_gen: v7x
topology: tpu7x:2x2x1
jax: 0.10.0
libtpu: 0.0.40
codegen_flags: <defaults>
</compile_context>

<pallas_src>
import jax
import jax.numpy as jnp
from jax.experimental import pallas as pl
from jax.experimental.pallas import tpu as pltpu


def pi_forward_kernel(xT_ref, w1_ref, b1_ref, w2_ref, b2_ref, o_ref, m_ref, s_ref):
    j = pl.program_id(0)
    n = pl.num_programs(0)
    tb = xT_ref.shape[1]                                    # lane-tile width (static)

    @pl.when(j == 0)
    def _init():
        m_ref[...] = jnp.full_like(m_ref, -jnp.inf)         # running max  (action, 1)
        s_ref[...] = jnp.zeros_like(s_ref)                  # running sum  (action, 1)

    # Hidden layer: W1 @ x^T + b1, ReLU        -> (hidden, tb)  on the MXU.
    xT = xT_ref[...]                                        # (obs, tb)
    h = jnp.dot(w1_ref[...], xT, preferred_element_type=jnp.float32) + b1_ref[...]
    h = jnp.maximum(h, 0.0)

    # Output layer: W2 @ h + b2               -> (action, tb)
    logits = jnp.dot(w2_ref[...], h, preferred_element_type=jnp.float32) + b2_ref[...]

    # Stash raw logits for this tile into the VMEM-resident (action, B) output.
    off = pl.multiple_of(j * tb, tb)
    o_ref[:, pl.ds(off, tb)] = logits

    # Online softmax statistics over the batch (lane) axis  == dim=0 softmax.
    tile_max = jnp.max(logits, axis=-1, keepdims=True)      # (action, 1)
    m_new = jnp.maximum(m_ref[...], tile_max)
    s_ref[...] = (s_ref[...] * jnp.exp(m_ref[...] - m_new)
                  + jnp.sum(jnp.exp(logits - m_new), axis=-1, keepdims=True))
    m_ref[...] = m_new

    @pl.when(j == n - 1)
    def _finalize():
        inv_s = pl.reciprocal(s_ref[...], approx=True)      # EUP vrcp (free slot)
        o_ref[...] = jnp.exp(o_ref[...] - m_ref[...]) * inv_s


def _pick_lane_tile(B, requested=None, cap=2048):
    """Largest multiple-of-128 tile dividing B (capped); else one full tile."""
    if requested is not None and requested <= B and B % requested == 0:
        return requested
    if B % 128 != 0:
        return B                                            # full-extent block: always legal
    tb = min(B, cap)
    tb -= tb % 128
    while B % tb != 0:
        tb -= 128
    return tb


def pi_forward(x, w1, b1, w2, b2, *, lane_tile=None):
    """x: (B, obs); w1: (hidden, obs); b1: (hidden,); w2: (action, hidden); b2: (action,).
    Weights are in PyTorch nn.Linear (out, in) layout. Returns (B, action)."""
    B, obs = x.shape
    hidden = w1.shape[0]
    action = w2.shape[0]

    tb = _pick_lane_tile(B, lane_tile)
    n_tiles = B // tb

    xT = jnp.asarray(x, jnp.float32).T                      # (obs, B): batch on lanes
    b1c = jnp.asarray(b1, jnp.float32).reshape(hidden, 1)
    b2c = jnp.asarray(b2, jnp.float32).reshape(action, 1)

    outT = pl.pallas_call(
        pi_forward_kernel,
        out_shape=jax.ShapeDtypeStruct((action, B), jnp.float32),
        grid=(n_tiles,),
        in_specs=[
            pl.BlockSpec((obs, tb), lambda j: (0, j)),      # x tile marches over lanes
            pl.BlockSpec((hidden, obs), lambda j: (0, 0)),  # weights pinned VMEM-resident
            pl.BlockSpec((hidden, 1), lambda j: (0, 0)),
            pl.BlockSpec((action, hidden), lambda j: (0, 0)),
            pl.BlockSpec((action, 1), lambda j: (0, 0)),
        ],
        # Constant block index -> output stays resident in VMEM across the grid
        # and is written back to HBM once, after the final normalization step.
        out_specs=pl.BlockSpec((action, B), lambda j: (0, 0)),
        scratch_shapes=[
            pltpu.VMEM((action, 1), jnp.float32),           # running max
            pltpu.VMEM((action, 1), jnp.float32),           # running sum of exp
        ],
        compiler_params=pltpu.CompilerParams(
            dimension_semantics=("arbitrary",)),            # online-softmax carry
    )(xT, jnp.asarray(w1, jnp.float32), b1c, jnp.asarray(w2, jnp.float32), b2c)

    return outT.T                            # back to (B, action), matches PyTorch


def _init_params(key, observation_space, hidden_dim, action_space):
    # Deterministic synthetic init, PyTorch nn.Linear (out, in) layout and scale.
    k1, k2, k3, k4 = jax.random.split(key, 4)
    lim1 = 1.0 / (observation_space ** 0.5)
    lim2 = 1.0 / (hidden_dim ** 0.5)
    w1 = jax.random.uniform(k1, (hidden_dim, observation_space),
                            jnp.float32, -lim1, lim1)
    b1 = jax.random.uniform(k2, (hidden_dim,), jnp.float32, -lim1, lim1)
    w2 = jax.random.uniform(k3, (action_space, hidden_dim),
                            jnp.float32, -lim2, lim2)
    b2 = jax.random.uniform(k4, (action_space,), jnp.float32, -lim2, lim2)
    return w1, b1, w2, b2


if __name__ == "__main__":
    # CartPole-like dims; hidden_dim matches the module default (128).
    # B = a rollout / vectorized-env batch handled in ONE kernel launch.
    B = 256
    observation_space = 4
    hidden_dim = 128
    action_space = 2

    key = jax.random.PRNGKey(0)
    kx, kp = jax.random.split(key)
    x = jax.random.normal(kx, (B, observation_space), dtype=jnp.float32)
    w1, b1, w2, b2 = _init_params(kp, observation_space, hidden_dim, action_space)

    # lane_tile=128 -> 2 grid steps, exercising the cross-tile online softmax.
    out = pi_forward(x, w1, b1, w2, b2, lane_tile=128)
    out = jax.block_until_ready(out)

    # Pure-JAX reference (same semantics as the PyTorch forward, dim=0 softmax).
    h_ref = jnp.maximum(x @ w1.T + b1, 0.0)
    logits_ref = h_ref @ w2.T + b2
    ref = jax.nn.softmax(logits_ref, axis=0)

    assert out.shape == (B, action_space)
    assert not bool(jnp.any(jnp.isnan(out)))
    # approx reciprocal (EUP vrcp) has ~1e-3 relative error -> loosened tolerance.
    assert jnp.allclose(out, ref, rtol=1e-2, atol=1e-7), float(jnp.max(jnp.abs(out - ref)))

    print("KERNEL_OK")
</pallas_src>

<mosaic_0001>
module attributes {stable_mosaic.version = 11 : i64} {
  func.func @pi_forward_kernel(%arg0: i32, %arg1: memref<4x128xf32, #tpu.memory_space<vmem>>, %arg2: memref<128x4xf32, #tpu.memory_space<vmem>>, %arg3: memref<128x1xf32, #tpu.memory_space<vmem>>, %arg4: memref<2x128xf32, #tpu.memory_space<vmem>>, %arg5: memref<2x1xf32, #tpu.memory_space<vmem>>, %arg6: memref<2x256xf32, #tpu.memory_space<vmem>>, %arg7: memref<2x1xf32, #tpu.memory_space<vmem>>, %arg8: memref<2x1xf32, #tpu.memory_space<vmem>>) attributes {dimension_semantics = [#tpu.dimension_semantics<arbitrary>], iteration_bounds = array<i64: 2>, scalar_prefetch = 0 : i64, scratch_operands = 2 : i64, tpu.core_type = #tpu.core_type<tc>, window_params = [{transform_indices = @transform_0, window_bounds = array<i64: 4, 128>}, {pipeline_mode = #tpu.pipeline_mode<synchronous>, transform_indices = @transform_1, window_bounds = array<i64: 128, 4>}, {pipeline_mode = #tpu.pipeline_mode<synchronous>, transform_indices = @transform_2, window_bounds = array<i64: 128, 1>}, {pipeline_mode = #tpu.pipeline_mode<synchronous>, transform_indices = @transform_3, window_bounds = array<i64: 2, 128>}, {pipeline_mode = #tpu.pipeline_mode<synchronous>, transform_indices = @transform_4, window_bounds = array<i64: 2, 1>}, {pipeline_mode = #tpu.pipeline_mode<synchronous>, transform_indices = @transform_5, window_bounds = array<i64: 2, 256>}]} {
    %c0_i32 = arith.constant 0 : i32
    %0 = arith.cmpi eq, %arg0, %c0_i32 : i32
    %1 = arith.extui %0 : i1 to i32
    %c0_i32_0 = arith.constant 0 : i32
    %2 = arith.cmpi ne, %1, %c0_i32_0 : i32
    scf.if %2 {
      %cst_26 = arith.constant 0xFF800000 : f32
      %40 = vector.broadcast %cst_26 : f32 to vector<2x1xf32>
      %c0_27 = arith.constant 0 : index
      %c0_28 = arith.constant 0 : index
      %41 = vector.load %arg7[%c0_27, %c0_28] : memref<2x1xf32, #tpu.memory_space<vmem>>, vector<2x1xf32>
      tpu.vector_store %arg7[%c0_27, %c0_28], %40 {strides = array<i32>} : memref<2x1xf32, #tpu.memory_space<vmem>>, vector<2x1xf32>,
      %cst_29 = arith.constant 0.000000e+00 : f32
      %42 = vector.broadcast %cst_29 : f32 to vector<2x1xf32>
      %c0_30 = arith.constant 0 : index
      %c0_31 = arith.constant 0 : index
      %43 = vector.load %arg8[%c0_30, %c0_31] : memref<2x1xf32, #tpu.memory_space<vmem>>, vector<2x1xf32>
      tpu.vector_store %arg8[%c0_30, %c0_31], %42 {strides = array<i32>} : memref<2x1xf32, #tpu.memory_space<vmem>>, vector<2x1xf32>,
    } else {
    }
    %c0 = arith.constant 0 : index
    %c0_1 = arith.constant 0 : index
    %3 = vector.load %arg1[%c0, %c0_1] : memref<4x128xf32, #tpu.memory_space<vmem>>, vector<4x128xf32>
    %c0_2 = arith.constant 0 : index
    %c0_3 = arith.constant 0 : index
    %4 = vector.load %arg2[%c0_2, %c0_3] : memref<128x4xf32, #tpu.memory_space<vmem>>, vector<128x4xf32>
    %cst = arith.constant dense<0.000000e+00> : vector<128x128xf32>
    %5 = tpu.matmul %4, %3, %cst {dimension_numbers = #tpu.dot_dimension_numbers<[1], [0], [0], [1], [0, 0, 1, 1], [], []>} : vector<128x4xf32>, vector<4x128xf32>, vector<128x128xf32> -> vector<128x128xf32>
    %c0_4 = arith.constant 0 : index
    %c0_5 = arith.constant 0 : index
    %6 = vector.load %arg3[%c0_4, %c0_5] : memref<128x1xf32, #tpu.memory_space<vmem>>, vector<128x1xf32>
    %7 = vector.broadcast %6 : vector<128x1xf32> to vector<128x128xf32>
    %8 = arith.addf %5, %7 : vector<128x128xf32>
    %cst_6 = arith.constant 0.000000e+00 : f32
    %9 = vector.broadcast %cst_6 : f32 to vector<128x128xf32>
    %10 = arith.maximumf %8, %9 : vector<128x128xf32>
    %c0_7 = arith.constant 0 : index
    %c0_8 = arith.constant 0 : index
    %11 = vector.load %arg4[%c0_7, %c0_8] : memref<2x128xf32, #tpu.memory_space<vmem>>, vector<2x128xf32>
    %cst_9 = arith.constant dense<0.000000e+00> : vector<2x128xf32>
    %12 = tpu.matmul %11, %10, %cst_9 {dimension_numbers = #tpu.dot_dimension_numbers<[1], [0], [0], [1], [0, 0, 1, 1], [], []>} : vector<2x128xf32>, vector<128x128xf32>, vector<2x128xf32> -> vector<2x128xf32>
    %c0_10 = arith.constant 0 : index
    %c0_11 = arith.constant 0 : index
    %13 = vector.load %arg5[%c0_10, %c0_11] : memref<2x1xf32, #tpu.memory_space<vmem>>, vector<2x1xf32>
    %14 = vector.broadcast %13 : vector<2x1xf32> to vector<2x128xf32>
    %15 = arith.addf %12, %14 : vector<2x128xf32>
    %c128_i32 = arith.constant 128 : i32
    %16 = arith.muli %arg0, %c128_i32 : i32
    %17 = tpu.assume_multiple %16, 128 : i32
    %c0_12 = arith.constant 0 : index
    %18 = arith.index_cast %17 : i32 to index
    %19 = vector.load %arg6[%c0_12, %18] : memref<2x256xf32, #tpu.memory_space<vmem>>, vector<2x128xf32>
    tpu.vector_store %arg6[%c0_12, %18], %15 {strides = array<i32>} : memref<2x256xf32, #tpu.memory_space<vmem>>, vector<2x128xf32>,
    %cst_13 = arith.constant dense<0xFF800000> : vector<2xf32>
    %20 = vector.multi_reduction <maximumf>, %15, %cst_13 [1] : vector<2x128xf32> to vector<2xf32>
    %21 = vector.shape_cast %20 : vector<2xf32> to vector<2x1xf32>
    %c0_14 = arith.constant 0 : index
    %c0_15 = arith.constant 0 : index
    %22 = vector.load %arg7[%c0_14, %c0_15] : memref<2x1xf32, #tpu.memory_space<vmem>>, vector<2x1xf32>
    %23 = arith.maximumf %22, %21 : vector<2x1xf32>
    %c0_16 = arith.constant 0 : index
    %c0_17 = arith.constant 0 : index
    %24 = vector.load %arg8[%c0_16, %c0_17] : memref<2x1xf32, #tpu.memory_space<vmem>>, vector<2x1xf32>
    %c0_18 = arith.constant 0 : index
    %c0_19 = arith.constant 0 : index
    %25 = vector.load %arg7[%c0_18, %c0_19] : memref<2x1xf32, #tpu.memory_space<vmem>>, vector<2x1xf32>
    %26 = arith.subf %25, %23 : vector<2x1xf32>
    %27 = math.exp %26 : vector<2x1xf32>
    %28 = arith.mulf %24, %27 : vector<2x1xf32>
    %29 = vector.broadcast %23 : vector<2x1xf32> to vector<2x128xf32>
    %30 = arith.subf %15, %29 : vector<2x128xf32>
    %31 = math.exp %30 : vector<2x128xf32>
    %cst_20 = arith.constant dense<0.000000e+00> : vector<2xf32>
    %32 = vector.multi_reduction <add>, %31, %cst_20 [1] : vector<2x128xf32> to vector<2xf32>
    %33 = vector.shape_cast %32 : vector<2xf32> to vector<2x1xf32>
    %34 = arith.addf %28, %33 : vector<2x1xf32>
    %c0_21 = arith.constant 0 : index
    %c0_22 = arith.constant 0 : index
    %35 = vector.load %arg8[%c0_21, %c0_22] : memref<2x1xf32, #tpu.memory_space<vmem>>, vector<2x1xf32>
    tpu.vector_store %arg8[%c0_21, %c0_22], %34 {strides = array<i32>} : memref<2x1xf32, #tpu.memory_space<vmem>>, vector<2x1xf32>,
    %c0_23 = arith.constant 0 : index
    %c0_24 = arith.constant 0 : index
    %36 = vector.load %arg7[%c0_23, %c0_24] : memref<2x1xf32, #tpu.memory_space<vmem>>, vector<2x1xf32>
    tpu.vector_store %arg7[%c0_23, %c0_24], %23 {strides = array<i32>} : memref<2x1xf32, #tpu.memory_space<vmem>>, vector<2x1xf32>,
    %c1_i32 = arith.constant 1 : i32
    %37 = arith.cmpi eq, %arg0, %c1_i32 : i32
    %38 = arith.extui %37 : i1 to i32
    %c0_i32_25 = arith.constant 0 : i32
    %39 = arith.cmpi ne, %38, %c0_i32_25 : i32
    scf.if %39 {
      %c0_26 = arith.constant 0 : index
      %c0_27 = arith.constant 0 : index
      %40 = vector.load %arg8[%c0_26, %c0_27] : memref<2x1xf32, #tpu.memory_space<vmem>>, vector<2x1xf32>
      %41 = tpu.reciprocal %40 {approx = true} : vector<2x1xf32> -> vector<2x1xf32>
      %c0_28 = arith.constant 0 : index
      %c0_29 = arith.constant 0 : index
      %42 = vector.load %arg6[%c0_28, %c0_29] : memref<2x256xf32, #tpu.memory_space<vmem>>, vector<2x256xf32>
      %c0_30 = arith.constant 0 : index
      %c0_31 = arith.constant 0 : index
      %43 = vector.load %arg7[%c0_30, %c0_31] : memref<2x1xf32, #tpu.memory_space<vmem>>, vector<2x1xf32>
      %44 = vector.broadcast %43 : vector<2x1xf32> to vector<2x256xf32>
      %45 = arith.subf %42, %44 : vector<2x256xf32>
      %46 = math.exp %45 : vector<2x256xf32>
      %47 = vector.broadcast %41 : vector<2x1xf32> to vector<2x256xf32>
      %48 = arith.mulf %46, %47 : vector<2x256xf32>
      %c0_32 = arith.constant 0 : index
      %c0_33 = arith.constant 0 : index
      %49 = vector.load %arg6[%c0_32, %c0_33] : memref<2x256xf32, #tpu.memory_space<vmem>>, vector<2x256xf32>
      tpu.vector_store %arg6[%c0_32, %c0_33], %48 {strides = array<i32>} : memref<2x256xf32, #tpu.memory_space<vmem>>, vector<2x256xf32>,
    } else {
    }
    return
  }
  func.func @transform_0(%arg0: i32) -> (i32, i32) {
    %c0_i32 = arith.constant 0 : i32
    %c0_i32_0 = arith.constant 0 : i32
    return %c0_i32, %arg0 : i32, i32
  }
  func.func @transform_1(%arg0: i32) -> (i32, i32) {
    %c0_i32 = arith.constant 0 : i32
    %c0_i32_0 = arith.constant 0 : i32
    %c0_i32_1 = arith.constant 0 : i32
    return %c0_i32, %c0_i32_0 : i32, i32
  }
  func.func @transform_2(%arg0: i32) -> (i32, i32) {
    %c0_i32 = arith.constant 0 : i32
    %c0_i32_0 = arith.constant 0 : i32
    %c0_i32_1 = arith.constant 0 : i32
    return %c0_i32, %c0_i32_0 : i32, i32
  }
  func.func @transform_3(%arg0: i32) -> (i32, i32) {
    %c0_i32 = arith.constant 0 : i32
    %c0_i32_0 = arith.constant 0 : i32
    %c0_i32_1 = arith.constant 0 : i32
    return %c0_i32, %c0_i32_0 : i32, i32
  }
  func.func @transform_4(%arg0: i32) -> (i32, i32) {
    %c0_i32 = arith.constant 0 : i32
    %c0_i32_0 = arith.constant 0 : i32
    %c0_i32_1 = arith.constant 0 : i32
    return %c0_i32, %c0_i32_0 : i32, i32
  }
  func.func @transform_5(%arg0: i32) -> (i32, i32) {
    %c0_i32 = arith.constant 0 : i32
    %c0_i32_0 = arith.constant 0 : i32
    %c0_i32_1 = arith.constant 0 : i32
    return %c0_i32, %c0_i32_0 : i32, i32
  }
}

</mosaic_0001>

<llo_original>
// kernel: tpu_custom_call.1
$region0: #{tpu_custom_call.1}
  #allocation0 [shape = 'u32[]', space=smem, size = 0x4, offset = 0x4, fixed_abs, tag = 'smem constant byte address 0x4 - core index']
  #allocation1 [shape = 'u32[144,128]{1,0:T(1,128)}', space=vmem, size = 0x12000, scoped, tag = 'internal scratch']
  #allocation2 [shape = 'f32[2,1]{1,0:T(2,128)}', space=vmem, size = 0x400, scoped, tag = 'scratch operand']
  #allocation3 [shape = 'f32[2,1]{1,0:T(2,128)}', space=vmem, size = 0x400, scoped, tag = 'scratch operand']
  %s0 = inlined_call_operand.vmem [shape: f32[4,256], index: 0, kind: input, shape index: {}]
  %s1 = inlined_call_operand.vmem [shape: f32[128,4], index: 1, kind: input, shape index: {}]
  %s2 = inlined_call_operand.vmem [shape: f32[128,1], index: 2, kind: input, shape index: {}]
  %s3 = inlined_call_operand.vmem [shape: f32[2,128], index: 3, kind: input, shape index: {}]
  %s4 = inlined_call_operand.vmem [shape: f32[2,1], index: 4, kind: input, shape index: {}]
  %s5 = inlined_call_operand.hbm [shape: f32[2,256], index: 5, kind: output, shape index: {}]
  %s6 = sld [smem:[#allocation0]]
  $region61: #{tpu_custom_call.1} parent=0
    _
  %s8 = ssub.s32 1, %s6
  %s9 = scalar_select 0, %s8, %s6
  $region1: #{tpu_custom_call.1} parent=0
    #allocation4 [shape = 'u8[2048]{0}', space=vmem, size = 0x800, scoped, tag = 'output window, operand 0, single buffered']
    #allocation5 [shape = 's32[2]{0}', space=sflag, size = 0x8, scoped, tag = 'scoped memory for tpu_custom_call.1']
    %10 = vsyncpa [#allocation5], 0
    loop: start=0, step=1, limit=4
    $region2: #{tpu_custom_call.1} parent=1 // loop_pre_header
      _
    $region3: #{tpu_custom_call.1} parent=1 // loop_header
      %s12 = sphi 0, %s16
      %p13 = scmp.ge.s32.totalorder %s12, 4
      %s22 = sphi 0, %s24
      %s25 = sphi 0, %s22
      %s26 = sphi 0, %s25
      %s42 = sphi 0, %s26
      %s46 = sphi 0, %s46
      %s48 = sphi 0, %s46
      %s49 = sphi 0, %s48
      %s63 = sphi 0, %s49
      %s67 = sphi 0, %s67
      %s69 = sphi 0, %s67
      %s70 = sphi 0, %s69
      %s84 = sphi 0, %s70
      %s88 = sphi 0, %s88
      %s90 = sphi 0, %s88
      %s91 = sphi 0, %s90
      %s105 = sphi 0, %s91
      %s109 = sphi 0, %s109
      %s111 = sphi 0, %s109
      %s112 = sphi 0, %s111
      %s126 = sphi 0, %s112
      %s130 = sphi 0, %s130
      %s132 = sphi 0, %s130
      %s133 = sphi 0, %s132
      %s147 = sphi 0, %s133
    $region4: #{tpu_custom_call.1} parent=1 // loop_header_branch
      %15 = sbr.rel (%p13) target = $region8
    $region5: #{tpu_custom_call.1} parent=1 // loop_body
      %s17 = ssub.s32 %s12, 1
      %s18 = ssub.s32 %s12, 2
      %s19 = sadd.s32 %s12, 1
      %s20 = ssub.s32 %s12, %s19
      %p21 = scmp.eq.s32.totalorder %s20, 0
      %s23 = sadd.s32 %s22, 1
      %s24 = scalar_select %p21, %s22, %s23
      %p27 = pneg %p21
      %p28 = scmp.eq.s32.totalorder %s12, 1
      %p29 = por %p27, %p28
      %p30 = scmp.ne.s32.totalorder %s22, %s25
      %p31 = scmp.eq.s32.totalorder %s12, 0
      %p32 = por %p30, %p31
      %p33 = scmp.ne.s32.totalorder %s22, %s25
      %p34 = scmp.eq.s32.totalorder %s17, 1
      %p35 = por %p33, %p34
      %p36 = scmp.ne.s32.totalorder %s25, %s26
      %p37 = scmp.eq.s32.totalorder %s17, 0
      %p38 = por %p36, %p37
      %p39 = scmp.ne.s32.totalorder %s25, %s26
      %p40 = scmp.eq.s32.totalorder %s18, 1
      %p41 = por %p39, %p40
      %p43 = scmp.ne.s32.totalorder %s26, %s42
      %p44 = scmp.eq.s32.totalorder %s18, 0
      %p45 = por %p43, %p44
      %s47 = sadd.s32 %s46, 1
      %p50 = scmp.eq.s32.totalorder %s12, 1
      %p51 = scmp.ne.s32.totalorder %s46, %s48
      %p52 = scmp.eq.s32.totalorder %s12, 0
      %p53 = por %p51, %p52
      %p54 = scmp.ne.s32.totalorder %s46, %s48
      %p55 = scmp.eq.s32.totalorder %s17, 1
      %p56 = por %p54, %p55
      %p57 = scmp.ne.s32.totalorder %s48, %s49
      %p58 = scmp.eq.s32.totalorder %s17, 0
      %p59 = por %p57, %p58
      %p60 = scmp.ne.s32.totalorder %s48, %s49
      %p61 = scmp.eq.s32.totalorder %s18, 1
      %p62 = por %p60, %p61
      %p64 = scmp.ne.s32.totalorder %s49, %s63
      %p65 = scmp.eq.s32.totalorder %s18, 0
      %p66 = por %p64, %p65
      %s68 = sadd.s32 %s67, 1
      %p71 = scmp.eq.s32.totalorder %s12, 1
      %p72 = scmp.ne.s32.totalorder %s67, %s69
      %p73 = scmp.eq.s32.totalorder %s12, 0
      %p74 = por %p72, %p73
      %p75 = scmp.ne.s32.totalorder %s67, %s69
      %p76 = scmp.eq.s32.totalorder %s17, 1
      %p77 = por %p75, %p76
      %p78 = scmp.ne.s32.totalorder %s69, %s70
      %p79 = scmp.eq.s32.totalorder %s17, 0
      %p80 = por %p78, %p79
      %p81 = scmp.ne.s32.totalorder %s69, %s70
      %p82 = scmp.eq.s32.totalorder %s18, 1
      %p83 = por %p81, %p82
      %p85 = scmp.ne.s32.totalorder %s70, %s84
      %p86 = scmp.eq.s32.totalorder %s18, 0
      %p87 = por %p85, %p86
      %s89 = sadd.s32 %s88, 1
      %p92 = scmp.eq.s32.totalorder %s12, 1
      %p93 = scmp.ne.s32.totalorder %s88, %s90
      %p94 = scmp.eq.s32.totalorder %s12, 0
      %p95 = por %p93, %p94
      %p96 = scmp.ne.s32.totalorder %s88, %s90
      %p97 = scmp.eq.s32.totalorder %s17, 1
      %p98 = por %p96, %p97
      %p99 = scmp.ne.s32.totalorder %s90, %s91
      %p100 = scmp.eq.s32.totalorder %s17, 0
      %p101 = por %p99, %p100
      %p102 = scmp.ne.s32.totalorder %s90, %s91
      %p103 = scmp.eq.s32.totalorder %s18, 1
      %p104 = por %p102, %p103
      %p106 = scmp.ne.s32.totalorder %s91, %s105
      %p107 = scmp.eq.s32.totalorder %s18, 0
      %p108 = por %p106, %p107
      %s110 = sadd.s32 %s109, 1
      %p113 = scmp.eq.s32.totalorder %s12, 1
      %p114 = scmp.ne.s32.totalorder %s109, %s111
      %p115 = scmp.eq.s32.totalorder %s12, 0
      %p116 = por %p114, %p115
      %p117 = scmp.ne.s32.totalorder %s109, %s111
      %p118 = scmp.eq.s32.totalorder %s17, 1
      %p119 = por %p117, %p118
      %p120 = scmp.ne.s32.totalorder %s111, %s112
      %p121 = scmp.eq.s32.totalorder %s17, 0
      %p122 = por %p120, %p121
      %p123 = scmp.ne.s32.totalorder %s111, %s112
      %p124 = scmp.eq.s32.totalorder %s18, 1
      %p125 = por %p123, %p124
      %p127 = scmp.ne.s32.totalorder %s112, %s126
      %p128 = scmp.eq.s32.totalorder %s18, 0
      %p129 = por %p127, %p128
      %s131 = sadd.s32 %s130, 1
      %p134 = scmp.eq.s32.totalorder %s12, 1
      %p135 = scmp.ne.s32.totalorder %s130, %s132
      %p136 = scmp.eq.s32.totalorder %s12, 0
      %p137 = por %p135, %p136
      %p138 = scmp.ne.s32.totalorder %s130, %s132
      %p139 = scmp.eq.s32.totalorder %s17, 1
      %p140 = por %p138, %p139
      %p141 = scmp.ne.s32.totalorder %s132, %s133
      %p142 = scmp.eq.s32.totalorder %s17, 0
      %p143 = por %p141, %p142
      %p144 = scmp.ne.s32.totalorder %s132, %s133
      %p145 = scmp.eq.s32.totalorder %s18, 1
      %p146 = por %p144, %p145
      %p148 = scmp.ne.s32.totalorder %s133, %s147
      %p149 = scmp.eq.s32.totalorder %s18, 0
      %p150 = por %p148, %p149
      %p151 = scmp.le.s32.totalorder 1, %s12
      %p152 = scmp.lt.s32.totalorder %s12, 3
      %p153 = pnand %p151, %p152
      %p154 = pneg %p153
      // Predicated region
      $region9: #{tpu_custom_call.1} parent=5 // pred_check
        _
      $region10: #{tpu_custom_call.1} parent=5 // pred_check_branch
        %156 = sbr.rel (%p153) target = $region12
      $region11: #{tpu_custom_call.1} parent=5 // pred_region
        %s157 = ssub.s32 %s12, 1
        // Predicated region
        $region13: #{tpu_custom_call.1} parent=11 // pred_check
          %p158 = pneg %p59
        $region14: #{tpu_custom_call.1} parent=11 // pred_check_branch
          %160 = sbr.rel (%p158) target = $region16
        $region15: #{tpu_custom_call.1} parent=11 // pred_region
          _
        $region16: #{tpu_custom_call.1} parent=11 // pred_fallthru
          _
        // Predicated region
        $region17: #{tpu_custom_call.1} parent=11 // pred_check
          %p161 = pneg %p80
        $region18: #{tpu_custom_call.1} parent=11 // pred_check_branch
          %163 = sbr.rel (%p161) target = $region20
        $region19: #{tpu_custom_call.1} parent=11 // pred_region
          _
        $region20: #{tpu_custom_call.1} parent=11 // pred_fallthru
          _
        // Predicated region
        $region21: #{tpu_custom_call.1} parent=11 // pred_check
          %p164 = pneg %p101
        $region22: #{tpu_custom_call.1} parent=11 // pred_check_branch
          %166 = sbr.rel (%p164) target = $region24
        $region23: #{tpu_custom_call.1} parent=11 // pred_region
          _
        $region24: #{tpu_custom_call.1} parent=11 // pred_fallthru
          _
        // Predicated region
        $region25: #{tpu_custom_call.1} parent=11 // pred_check
          %p167 = pneg %p122
        $region26: #{tpu_custom_call.1} parent=11 // pred_check_branch
          %169 = sbr.rel (%p167) target = $region28
        $region27: #{tpu_custom_call.1} parent=11 // pred_region
          _
        $region28: #{tpu_custom_call.1} parent=11 // pred_fallthru
          _
      $region12: #{tpu_custom_call.1} parent=5 // pred_fallthru
        _
      %p170 = scmp.lt.s32.totalorder %s12, 2
      // Predicated region
      $region29: #{tpu_custom_call.1} parent=5 // pred_check
        %p171 = pneg %p170
      $region30: #{tpu_custom_call.1} parent=5 // pred_check_branch
        %173 = sbr.rel (%p171) target = $region32
      $region31: #{tpu_custom_call.1} parent=5 // pred_region
        // Predicated region
        $region33: #{tpu_custom_call.1} parent=31 // pred_check
          %p174 = pneg %p32
        $region34: #{tpu_custom_call.1} parent=31 // pred_check_branch
          %176 = sbr.rel (%p174) target = $region36
        $region35: #{tpu_custom_call.1} parent=31 // pred_region
          %p177 = scmp.lt.s32.totalorder %s12, 1
          %s178 = scalar_select %p177, %s12, 1
          %s179 = smul.addr %s178, 4
          %s180 = scalar_lea.vmem %s0, %s179
        $region36: #{tpu_custom_call.1} parent=31 // pred_fallthru
          _
      $region32: #{tpu_custom_call.1} parent=5 // pred_fallthru
        _
      %p181 = scmp.le.s32.totalorder 1, %s12
      %p182 = scmp.lt.s32.totalorder %s12, 3
      %p183 = pnand %p181, %p182
      %p184 = pneg %p183
      // Predicated region
      $region37: #{tpu_custom_call.1} parent=5 // pred_check
        _
      $region38: #{tpu_custom_call.1} parent=5 // pred_check_branch
        %186 = sbr.rel (%p183) target = $region40
      $region39: #{tpu_custom_call.1} parent=5 // pred_region
        %s187 = ssub.s32 %s12, 1
        %p188 = scmp.lt.s32.totalorder %s17, 1
        %s189 = scalar_select %p188, %s17, 1
        %s190 = smul.addr %s189, 4
        %s191 = scalar_lea.vmem %s0, %s190
        %p192 = pneg %p38
        %p193 = pneg %p35
        %p194 = pneg %p59
        %p195 = pneg %p56
        %p196 = pneg %p80
        %p197 = pneg %p77
        %p198 = pneg %p101
        %p199 = pneg %p98
        %p200 = pneg %p122
        %p201 = pneg %p119
        %p202 = pneg %p143
        %p203 = pneg %p140
        %p204 = scmp.lt.s32.totalorder %s17, 1
        %s205 = scalar_select %p204, %s17, 1
        %s206 = smul.addr %s205, 4
        %s207 = scalar_lea.vmem %s0, %s206
        %p208 = scmp.eq.s32.totalorder %s17, 0
        // Predicated region
        $region41: #{tpu_custom_call.1} parent=39 // pred_check
          %p209 = pneg %p208
        $region42: #{tpu_custom_call.1} parent=39 // pred_check_branch
          %211 = sbr.rel (%p209) target = $region44
        $region43: #{tpu_custom_call.1} parent=39 // pred_region
          %vm212 = vcmask 1024
          %213 = vst.msk [vmem:[#allocation2] sm:$0x3] %vm212, -inf
          %214 = vst.msk [vmem:[#allocation3] sm:$0x3] %vm212, 0.0
        $region44: #{tpu_custom_call.1} parent=39 // pred_fallthru
          _
        %v215 = vld [vmem:[%s207] sm:$0xf]
        %v216 = vld [vmem:[%s1] sm:$0xff]
        %v217 = vld [vmem:[%s1 + $0x8] sm:$0xff]
        %v218 = vld [vmem:[%s1 + $0x10] sm:$0xff]
        %v219 = vld [vmem:[%s1 + $0x18] sm:$0xff]
        %v220 = vld [vmem:[%s1 + $0x20] sm:$0xff]
        %v221 = vld [vmem:[%s1 + $0x28] sm:$0xff]
        %v222 = vld [vmem:[%s1 + $0x30] sm:$0xff]
        %v223 = vld [vmem:[%s1 + $0x38] sm:$0xff]
        %v224 = vld [vmem:[%s1 + $0x40] sm:$0xff]
        %v225 = vld [vmem:[%s1 + $0x48] sm:$0xff]
        %v226 = vld [vmem:[%s1 + $0x50] sm:$0xff]
        %v227 = vld [vmem:[%s1 + $0x58] sm:$0xff]
        %v228 = vld [vmem:[%s1 + $0x60] sm:$0xff]
        %v229 = vld [vmem:[%s1 + $0x68] sm:$0xff]
        %v230 = vld [vmem:[%s1 + $0x70] sm:$0xff]
        %v231 = vld [vmem:[%s1 + $0x78] sm:$0xff]
        %v232 = vld [vmem:[%s2] sm:$0xff]
        %v233 = vld [vmem:[%s2 + $0x8] sm:$0xff]
        %v234 = vld [vmem:[%s2 + $0x10] sm:$0xff]
        %v235 = vld [vmem:[%s2 + $0x18] sm:$0xff]
        %v236 = vld [vmem:[%s2 + $0x20] sm:$0xff]
        %v237 = vld [vmem:[%s2 + $0x28] sm:$0xff]
        %v238 = vld [vmem:[%s2 + $0x30] sm:$0xff]
        %v239 = vld [vmem:[%s2 + $0x38] sm:$0xff]
        %v240 = vld [vmem:[%s2 + $0x40] sm:$0xff]
        %v241 = vld [vmem:[%s2 + $0x48] sm:$0xff]
        %v242 = vld [vmem:[%s2 + $0x50] sm:$0xff]
        %v243 = vld [vmem:[%s2 + $0x58] sm:$0xff]
        %v244 = vld [vmem:[%s2 + $0x60] sm:$0xff]
        %v245 = vld [vmem:[%s2 + $0x68] sm:$0xff]
        %v246 = vld [vmem:[%s2 + $0x70] sm:$0xff]
        %v247 = vld [vmem:[%s2 + $0x78] sm:$0xff]
        %249 = vset.pattern.permute.xlu0 0
        %250 = vperm.xlu0 %249, %v232
        %v251 = vpop.permute.xlu0 %250
        %254 = vset.pattern.permute.xlu0 0
        %255 = vperm.xlu0 %254, %v233
        %v256 = vpop.permute.xlu0 %255
        %259 = vset.pattern.permute.xlu0 0
        %260 = vperm.xlu0 %259, %v234
        %v261 = vpop.permute.xlu0 %260
        %264 = vset.pattern.permute.xlu0 0
        %265 = vperm.xlu0 %264, %v235
        %v266 = vpop.permute.xlu0 %265
        %269 = vset.pattern.permute.xlu0 0
        %270 = vperm.xlu0 %269, %v236
        %v271 = vpop.permute.xlu0 %270
        %274 = vset.pattern.permute.xlu0 0
        %275 = vperm.xlu0 %274, %v237
        %v276 = vpop.permute.xlu0 %275
        %279 = vset.pattern.permute.xlu0 0
        %280 = vperm.xlu0 %279, %v238
        %v281 = vpop.permute.xlu0 %280
        %284 = vset.pattern.permute.xlu0 0
        %285 = vperm.xlu0 %284, %v239
        %v286 = vpop.permute.xlu0 %285
        %289 = vset.pattern.permute.xlu0 0
        %290 = vperm.xlu0 %289, %v240
        %v291 = vpop.permute.xlu0 %290
        %294 = vset.pattern.permute.xlu0 0
        %295 = vperm.xlu0 %294, %v241
        %v296 = vpop.permute.xlu0 %295
        %299 = vset.pattern.permute.xlu0 0
        %300 = vperm.xlu0 %299, %v242
        %v301 = vpop.permute.xlu0 %300
        %304 = vset.pattern.permute.xlu0 0
        %305 = vperm.xlu0 %304, %v243
        %v306 = vpop.permute.xlu0 %305
        %309 = vset.pattern.permute.xlu0 0
        %310 = vperm.xlu0 %309, %v244
        %v311 = vpop.permute.xlu0 %310
        %314 = vset.pattern.permute.xlu0 0
        %315 = vperm.xlu0 %314, %v245
        %v316 = vpop.permute.xlu0 %315
        %319 = vset.pattern.permute.xlu0 0
        %320 = vperm.xlu0 %319, %v246
        %v321 = vpop.permute.xlu0 %320
        %324 = vset.pattern.permute.xlu0 0
        %325 = vperm.xlu0 %324, %v247
        %v326 = vpop.permute.xlu0 %325
        %vm328 = vcmask 31744
        %v330 = vsel %vm328, %v216, 0
        %v333 = vsel %vm328, %v217, 0
        %v336 = vsel %vm328, %v218, 0
        %v339 = vsel %vm328, %v219, 0
        %v342 = vsel %vm328, %v220, 0
        %v345 = vsel %vm328, %v221, 0
        %v348 = vsel %vm328, %v222, 0
        %v351 = vsel %vm328, %v223, 0
        %v354 = vsel %vm328, %v224, 0
        %v357 = vsel %vm328, %v225, 0
        %v360 = vsel %vm328, %v226, 0
        %v363 = vsel %vm328, %v227, 0
        %v366 = vsel %vm328, %v228, 0
        %v369 = vsel %vm328, %v229, 0
        %v372 = vsel %vm328, %v230, 0
        %v375 = vsel %vm328, %v231, 0
        %vm377 = vcmask 1043456
        %v379 = vsel %vm377, %v215, 0
        %381 = vmatprep.subr.mxu0 0.0
        %382 = vmatpush1.msra.mxu0 %v379
        %383 = vmatprep.subr.mxu0 0.0
        %384 = vmatpush1.msra.mxu0 0.0
        %385 = vmatprep.subr.mxu0 0.0
        %386 = vmatpush1.msra.mxu0 0.0
        %387 = vmatprep.subr.mxu0 0.0
        %388 = vmatpush1.msra.mxu0 0.0
        %389 = vmatprep.subr.mxu0 0.0
        %390 = vmatpush1.msra.mxu0 0.0
        %391 = vmatprep.subr.mxu0 0.0
        %392 = vmatpush1.msra.mxu0 0.0
        %393 = vmatprep.subr.mxu0 0.0
        %394 = vmatpush1.msra.mxu0 0.0
        %395 = vmatprep.subr.mxu0 0.0
        %396 = vmatpush1.msra.mxu0 0.0
        %397 = vmatprep.subr.mxu0 0.0
        %398 = vmatpush1.msra.mxu0 0.0
        %399 = vmatprep.subr.mxu0 0.0
        %400 = vmatpush1.msra.mxu0 0.0
        %401 = vmatprep.subr.mxu0 0.0
        %402 = vmatpush1.msra.mxu0 0.0
        %403 = vmatprep.subr.mxu0 0.0
        %404 = vmatpush1.msra.mxu0 0.0
        %405 = vmatprep.subr.mxu0 0.0
        %406 = vmatpush1.msra.mxu0 0.0
        %407 = vmatprep.subr.mxu0 0.0
        %408 = vmatpush1.msra.mxu0 0.0
        %409 = vmatprep.subr.mxu0 0.0
        %410 = vmatpush1.msra.mxu0 0.0
        %411 = vmatprep.subr.mxu0 0.0
        %412 = vmatpush1.msra.mxu0 0.0
        %413 = vmatprep.subr.mxu0 0.0
        %414 = vmatpush1.msra.mxu0 0.0
        %415 = vmatprep.subr.mxu0 0.0
        %416 = vmatpush1.msra.mxu0 0.0
        %417 = vmatprep.subr.mxu0 0.0
        %418 = vmatpush1.msra.mxu0 0.0
        %419 = vmatprep.subr.mxu0 0.0
        %420 = vmatpush1.msra.mxu0 0.0
        %421 = vmatprep.subr.mxu0 0.0
        %422 = vmatpush1.msra.mxu0 0.0
        %423 = vmatprep.subr.mxu0 0.0
        %424 = vmatpush1.msra.mxu0 0.0
        %425 = vmatprep.subr.mxu0 0.0
        %426 = vmatpush1.msra.mxu0 0.0
        %427 = vmatprep.subr.mxu0 0.0
        %428 = vmatpush1.msra.mxu0 0.0
        %429 = vmatprep.subr.mxu0 0.0
        %430 = vmatpush1.msra.mxu0 0.0
        %431 = vmatprep.subr.mxu0 0.0
        %432 = vmatpush1.msra.mxu0 0.0
        %433 = vmatprep.subr.mxu0 0.0
        %434 = vmatpush1.msra.mxu0 0.0
        %435 = vmatprep.subr.mxu0 0.0
        %436 = vmatpush1.msra.mxu0 0.0
        %437 = vmatprep.subr.mxu0 0.0
        %438 = vmatpush1.msra.mxu0 0.0
        %439 = vmatprep.subr.mxu0 0.0
        %440 = vmatpush1.msra.mxu0 0.0
        %441 = vmatprep.subr.mxu0 0.0
        %442 = vmatpush1.msra.mxu0 0.0
        %443 = vmatprep.subr.mxu0 0.0
        %444 = vmatpush1.msra.mxu0 0.0
        %445 = vmatprep.mubr.f32.mxu0 0.0
        %446 = vmatmul.mubr.f32.gmra.mrb[0].mxu0 %v330
        %v447 = vpop.f32.mrb[0].mxu0
        %v448 = vadd.f32 %v251, %v447
        %v449 = vpop.f32.mrb[0].mxu0
        %450 = vmatprep.mubr.f32.mxu0 0.0
        %451 = vmatmul.mubr.f32.gmra.mrb[0].mxu0 %v333
        %v452 = vpop.f32.mrb[0].mxu0
        %v453 = vadd.f32 %v256, %v452
        %v454 = vpop.f32.mrb[0].mxu0
        %455 = vmatprep.mubr.f32.mxu0 0.0
        %456 = vmatmul.mubr.f32.gmra.mrb[0].mxu0 %v336
        %v457 = vpop.f32.mrb[0].mxu0
        %v458 = vadd.f32 %v261, %v457
        %v459 = vpop.f32.mrb[0].mxu0
        %460 = vmatprep.mubr.f32.mxu0 0.0
        %461 = vmatmul.mubr.f32.gmra.mrb[0].mxu0 %v339
        %v462 = vpop.f32.mrb[0].mxu0
        %v463 = vadd.f32 %v266, %v462
        %v464 = vpop.f32.mrb[0].mxu0
        %465 = vmatprep.mubr.f32.mxu0 0.0
        %466 = vmatmul.mubr.f32.gmra.mrb[0].mxu0 %v342
        %v467 = vpop.f32.mrb[0].mxu0
        %v468 = vadd.f32 %v271, %v467
        %v469 = vpop.f32.mrb[0].mxu0
        %470 = vmatprep.mubr.f32.mxu0 0.0
        %471 = vmatmul.mubr.f32.gmra.mrb[0].mxu0 %v345
        %v472 = vpop.f32.mrb[0].mxu0
        %v473 = vadd.f32 %v276, %v472
        %v474 = vpop.f32.mrb[0].mxu0
        %475 = vmatprep.mubr.f32.mxu0 0.0
        %476 = vmatmul.mubr.f32.gmra.mrb[0].mxu0 %v348
        %v477 = vpop.f32.mrb[0].mxu0
        %v478 = vadd.f32 %v281, %v477
        %v479 = vpop.f32.mrb[0].mxu0
        %480 = vmatprep.mubr.f32.mxu0 0.0
        %481 = vmatmul.mubr.f32.gmra.mrb[0].mxu0 %v351
        %v482 = vpop.f32.mrb[0].mxu0
        %v483 = vadd.f32 %v286, %v482
        %v484 = vpop.f32.mrb[0].mxu0
        %485 = vmatprep.mubr.f32.mxu0 0.0
        %486 = vmatmul.mubr.f32.gmra.mrb[0].mxu0 %v354
        %v487 = vpop.f32.mrb[0].mxu0
        %v488 = vadd.f32 %v291, %v487
        %v489 = vpop.f32.mrb[0].mxu0
        %490 = vmatprep.mubr.f32.mxu0 0.0
        %491 = vmatmul.mubr.f32.gmra.mrb[0].mxu0 %v357
        %v492 = vpop.f32.mrb[0].mxu0
        %v493 = vadd.f32 %v296, %v492
        %v494 = vpop.f32.mrb[0].mxu0
        %495 = vmatprep.mubr.f32.mxu0 0.0
        %496 = vmatmul.mubr.f32.gmra.mrb[0].mxu0 %v360
        %v497 = vpop.f32.mrb[0].mxu0
        %v498 = vadd.f32 %v301, %v497
        %v499 = vpop.f32.mrb[0].mxu0
        %500 = vmatprep.mubr.f32.mxu0 0.0
        %501 = vmatmul.mubr.f32.gmra.mrb[0].mxu0 %v363
        %v502 = vpop.f32.mrb[0].mxu0
        %v503 = vadd.f32 %v306, %v502
        %v504 = vpop.f32.mrb[0].mxu0
        %505 = vmatprep.mubr.f32.mxu0 0.0
        %506 = vmatmul.mubr.f32.gmra.mrb[0].mxu0 %v366
        %v507 = vpop.f32.mrb[0].mxu0
        %v508 = vadd.f32 %v311, %v507
        %v509 = vpop.f32.mrb[0].mxu0
        %510 = vmatprep.mubr.f32.mxu0 0.0
        %511 = vmatmul.mubr.f32.gmra.mrb[0].mxu0 %v369
        %v512 = vpop.f32.mrb[0].mxu0
        %v513 = vadd.f32 %v316, %v512
        %v514 = vpop.f32.mrb[0].mxu0
        %515 = vmatprep.mubr.f32.mxu0 0.0
        %516 = vmatmul.mubr.f32.gmra.mrb[0].mxu0 %v372
        %v517 = vpop.f32.mrb[0].mxu0
        %v518 = vadd.f32 %v321, %v517
        %v519 = vpop.f32.mrb[0].mxu0
        %520 = vmatprep.mubr.f32.mxu0 0.0
        %521 = vmatmul.mubr.f32.gmra.mrb[0].mxu0 %v375
        %v522 = vpop.f32.mrb[0].mxu0
        %v523 = vadd.f32 %v326, %v522
        %v524 = vpop.f32.mrb[0].mxu0
        %525 = vdwg.mxu0
        %v526 = vmax.f32 %v448, 0.0
        %v527 = vmax.f32 %v453, 0.0
        %v528 = vmax.f32 %v458, 0.0
        %v529 = vmax.f32 %v463, 0.0
        %v530 = vmax.f32 %v468, 0.0
        %v531 = vmax.f32 %v473, 0.0
        %v532 = vmax.f32 %v478, 0.0
        %v533 = vmax.f32 %v483, 0.0
        %v534 = vmax.f32 %v488, 0.0
        %v535 = vmax.f32 %v493, 0.0
        %v536 = vmax.f32 %v498, 0.0
        %v537 = vmax.f32 %v503, 0.0
        %v538 = vmax.f32 %v508, 0.0
        %v539 = vmax.f32 %v513, 0.0
        %v540 = vmax.f32 %v518, 0.0
        %v541 = vmax.f32 %v523, 0.0
        %v542 = vld [vmem:[%s3] sm:$0x3]
        %v543 = vld [vmem:[%s4] sm:$0x3]
        %545 = vset.pattern.permute.xlu0 0
        %546 = vperm.xlu0 %545, %v543
        %v547 = vpop.permute.xlu0 %546
        %549 = vmatprep.subr.mxu0 0.0
        %550 = vmatpush1.msra.mxu0 %v526
        %551 = vmatprep.subr.mxu0 0.0
        %552 = vmatpush1.msra.mxu0 %v527
        %553 = vmatprep.subr.mxu0 0.0
        %554 = vmatpush1.msra.mxu0 %v528
        %555 = vmatprep.subr.mxu0 0.0
        %556 = vmatpush1.msra.mxu0 %v529
        %557 = vmatprep.subr.mxu0 0.0
        %558 = vmatpush1.msra.mxu0 %v530
        %559 = vmatprep.subr.mxu0 0.0
        %560 = vmatpush1.msra.mxu0 %v531
        %561 = vmatprep.subr.mxu0 0.0
        %562 = vmatpush1.msra.mxu0 %v532
        %563 = vmatprep.subr.mxu0 0.0
        %564 = vmatpush1.msra.mxu0 %v533
        %565 = vmatprep.subr.mxu0 0.0
        %566 = vmatpush1.msra.mxu0 %v534
        %567 = vmatprep.subr.mxu0 0.0
        %568 = vmatpush1.msra.mxu0 %v535
        %569 = vmatprep.subr.mxu0 0.0
        %570 = vmatpush1.msra.mxu0 %v536
        %571 = vmatprep.subr.mxu0 0.0
        %572 = vmatpush1.msra.mxu0 %v537
        %573 = vmatprep.subr.mxu0 0.0
        %574 = vmatpush1.msra.mxu0 %v538
        %575 = vmatprep.subr.mxu0 0.0
        %576 = vmatpush1.msra.mxu0 %v539
        %577 = vmatprep.subr.mxu0 0.0
        %578 = vmatpush1.msra.mxu0 %v540
        %579 = vmatprep.subr.mxu0 0.0
        %580 = vmatpush1.msra.mxu0 %v541
        %581 = vmatprep.subr.mxu0 0.0
        %582 = vmatpush1.msra.mxu0 0.0
        %583 = vmatprep.subr.mxu0 0.0
        %584 = vmatpush1.msra.mxu0 0.0
        %585 = vmatprep.subr.mxu0 0.0
        %586 = vmatpush1.msra.mxu0 0.0
        %587 = vmatprep.subr.mxu0 0.0
        %588 = vmatpush1.msra.mxu0 0.0
        %589 = vmatprep.subr.mxu0 0.0
        %590 = vmatpush1.msra.mxu0 0.0
        %591 = vmatprep.subr.mxu0 0.0
        %592 = vmatpush1.msra.mxu0 0.0
        %593 = vmatprep.subr.mxu0 0.0
        %594 = vmatpush1.msra.mxu0 0.0
        %595 = vmatprep.subr.mxu0 0.0
        %596 = vmatpush1.msra.mxu0 0.0
        %597 = vmatprep.subr.mxu0 0.0
        %598 = vmatpush1.msra.mxu0 0.0
        %599 = vmatprep.subr.mxu0 0.0
        %600 = vmatpush1.msra.mxu0 0.0
        %601 = vmatprep.subr.mxu0 0.0
        %602 = vmatpush1.msra.mxu0 0.0
        %603 = vmatprep.subr.mxu0 0.0
        %604 = vmatpush1.msra.mxu0 0.0
        %605 = vmatprep.subr.mxu0 0.0
        %606 = vmatpush1.msra.mxu0 0.0
        %607 = vmatprep.subr.mxu0 0.0
        %608 = vmatpush1.msra.mxu0 0.0
        %609 = vmatprep.subr.mxu0 0.0
        %610 = vmatpush1.msra.mxu0 0.0
        %611 = vmatprep.subr.mxu0 0.0
        %612 = vmatpush1.msra.mxu0 0.0
        %613 = vmatprep.mubr.f32.mxu0 0.0
        %614 = vmatmul.mubr.f32.gmra.mrb[0].mxu0 %v542
        %v615 = vpop.f32.mrb[0].mxu0
        %v616 = vadd.f32 %v547, %v615
        %v617 = vpop.f32.mrb[0].mxu0
        %618 = vdwg.mxu0
        %s619 = smul.u32 %s17, 128
        %s620 = sshra.s32 %s619, 7
        %s621 = sand.u32 %s619, 127
        %s622 = smul.addr %s620, 2
        %s623 = scalar_lea.vmem [#allocation4], %s622
        %624 = vst [vmem:[%s623] sm:$0x3] %v616
        %vm625 = vcmask 1041408
        %v626 = vsel %vm625, %v616, -inf
        %627 = vmax.xlane.f32.xlu0 %v626
        %v628 = vpop.xlane.xlu0 %627
        %v629 = vld [vmem:[#allocation2] sm:$0x3]
        %v630 = vmax.f32 %v629, %v628
        %v631 = vld [vmem:[#allocation3] sm:$0x3]
        %v632 = vsub.f32 %v629, %v630
        %v633 = vmul.f32 %v632, 1.442695
        %v634 = vpow.pop %v633
        %v635 = vmul.f32 %v631, %v634
        %637 = vset.pattern.permute.xlu0 0
        %638 = vperm.xlu0 %637, %v630
        %v639 = vpop.permute.xlu0 %638
        %v641 = vsub.f32 %v616, %v639
        %v642 = vmul.f32 %v641, 1.442695
        %v643 = vpow.pop %v642
        %v644 = vsel %vm625, %v643, 0.0
        %645 = vadd.xlane.f32.xlu0 %v644
        %v646 = vpop.xlane.xlu0 %645
        %v647 = vadd.f32 %v635, %v646
        %vm648 = vcmask 1024
        %649 = vst.msk [vmem:[#allocation3] sm:$0x3] %vm648, %v647
        %650 = vst.msk [vmem:[#allocation2] sm:$0x3] %vm648, %v630
        %p651 = scmp.eq.s32.totalorder %s17, 1
        // Predicated region
        $region45: #{tpu_custom_call.1} parent=39 // pred_check
          %p652 = pneg %p651
        $region46: #{tpu_custom_call.1} parent=39 // pred_check_branch
          %654 = sbr.rel (%p652) target = $region48
        $region47: #{tpu_custom_call.1} parent=39 // pred_region
          %v655 = vld [vmem:[#allocation3] sm:$0x3]
          %v656 = vrcp.pop %v655
          %v657 = vld [vmem:[#allocation4] sm:$0xf]
          %v658 = vld [vmem:[#allocation2] sm:$0x3]
          %660 = vset.pattern.permute.xlu0 0
          %661 = vperm.xlu0 %660, %v658
          %v662 = vpop.permute.xlu0 %661
          %v664 = vunpack.c.l.s4 269488144
          %v665 = vunpack.c.0.s8 %v664
          %v666 = vlaneseq
          %v667 = vshrl.u32 %v666, 7
          %v668 = vsub.s32 %v665, %v667
          %v669 = vrot.slane %v662, %v668
          %v671 = vsub.f32 %v657, %v669
          %v672 = vmul.f32 %v671, 1.442695
          %v673 = vpow.pop %v672
          %675 = vset.pattern.permute.xlu0 0
          %676 = vperm.xlu0 %675, %v656
          %v677 = vpop.permute.xlu0 %676
          %v679 = vunpack.c.l.s4 269488144
          %v680 = vunpack.c.0.s8 %v679
          %v681 = vlaneseq
          %v682 = vshrl.u32 %v681, 7
          %v683 = vsub.s32 %v680, %v682
          %v684 = vrot.slane %v677, %v683
          %v686 = vmul.f32 %v673, %v684
          %687 = vst [vmem:[#allocation4] sm:$0xf] %v686
        $region48: #{tpu_custom_call.1} parent=39 // pred_fallthru
          _
        // Predicated region
        $region49: #{tpu_custom_call.1} parent=39 // pred_check
          %p688 = pneg %p140
        $region50: #{tpu_custom_call.1} parent=39 // pred_check_branch
          %690 = sbr.rel (%p688) target = $region52
        $region51: #{tpu_custom_call.1} parent=39 // pred_region
          %s692 = ssub.s32 64, 64
          %693 = vsyncadd [#allocation5], %s692
          %s695 = sshll.u32 [#allocation4], 4
          %s696 = int_to_ptr.vmem [resolvable:$true] %s695
          %698 = dma.vmem_to_hbm [thread:$0]  %s696, 64, %s5, [#allocation5]
        $region52: #{tpu_custom_call.1} parent=39 // pred_fallthru
          _
        // Predicated region
        $region53: #{tpu_custom_call.1} parent=39 // pred_check
          %p699 = pneg %p140
        $region54: #{tpu_custom_call.1} parent=39 // pred_check_branch
          %701 = sbr.rel (%p699) target = $region56
        $region55: #{tpu_custom_call.1} parent=39 // pred_region
          %702 = dma.done [#allocation5], 64
        $region56: #{tpu_custom_call.1} parent=39 // pred_fallthru
          _
      $region40: #{tpu_custom_call.1} parent=5 // pred_fallthru
        _
      %p703 = scmp.le.s32.totalorder 2, %s12
      // Predicated region
      $region57: #{tpu_custom_call.1} parent=5 // pred_check
        %p704 = pneg %p703
      $region58: #{tpu_custom_call.1} parent=5 // pred_check_branch
        %706 = sbr.rel (%p704) target = $region60
      $region59: #{tpu_custom_call.1} parent=5 // pred_region
        %s707 = ssub.s32 %s12, 2
      $region60: #{tpu_custom_call.1} parent=5 // pred_fallthru
        _
    $region6: #{tpu_custom_call.1} parent=1 // loop_footer
      %s16 = sadd.s32 1, %s12
    $region7: #{tpu_custom_call.1} parent=1 // loop_footer_branch
      %11 = sbr.rel target = $region3
    $region8: #{tpu_custom_call.1} parent=1 // loop_exit
      _
    %708 = vsyncpa [#allocation5], 1
    %s709 = scalar_lea.sflag [#allocation5], 1
    %710 = vsyncpa %s709, 1

</llo_original>
